<compile_context>
chip_gen: v7x
topology: tpu7x:2x2x1
jax: 0.10.0
libtpu: 0.0.40
codegen_flags: <defaults>
</compile_context>

<pallas_src>
import functools
import math

import jax
import jax.numpy as jnp
from jax.experimental import pallas as pl
from jax.experimental.pallas import tpu as pltpu

BN_EPS = 1e-5        # nn.BatchNorm1d default eps
NORM_EPS = 1e-12     # F.normalize default eps
LANE = 128           # lane width / MXU-facing padding granularity


def _round_up(n, m):
    return ((n + m - 1) // m) * m


def _pad2(a, rows, cols):
    return jnp.pad(a, ((0, rows - a.shape[0]), (0, cols - a.shape[1])))


def _distill_kernel(x_ref, w1_ref, p1_ref, w2_ref, p2_ref, w3_ref, b3_ref,
                    o_ref, *, valid_rows):
    """Single-program kernel: whole (padded) problem resident in VMEM.

    x_ref, w*_ref are bf16 (MXU operands); p*_ref / b3_ref / output are f32.
    p*_ref rows are [linear bias, BN gamma, BN beta] stacked along sublanes.
    """
    b_pad = x_ref.shape[0]
    inv_n = 1.0 / float(valid_rows)

    # Row-validity mask: padded batch rows must not contaminate training-mode BN stats.
    if valid_rows < b_pad:
        row_ids = jax.lax.broadcasted_iota(jnp.int32, (b_pad, 1), 0)
        mask = (row_ids < valid_rows).astype(jnp.float32)
    else:
        mask = None

    def bn_relu(h, p):
        # Training-mode BatchNorm1d folded into one scale/shift; stats from a
        # single sum / sum-of-squares pass over the (masked) batch axis.
        gamma = p[1:2, :]
        beta = p[2:3, :]
        hm = h if mask is None else h * mask
        s = jnp.sum(hm, axis=0, keepdims=True)
        ssq = jnp.sum(hm * hm, axis=0, keepdims=True)
        mean = s * inv_n
        var = jnp.maximum(ssq * inv_n - mean * mean, 0.0)
        scale = gamma * jax.lax.rsqrt(var + BN_EPS)          # EUP, (1, h)
        shift = beta - mean * scale                          # (1, h)
        return jnp.maximum(h * scale + shift, 0.0)           # fused scale/shift + ReLU

    p1 = p1_ref[...]
    p2 = p2_ref[...]

    # Layer 1: Linear (bf16 MXU, f32 accumulate) -> BN -> ReLU
    h1 = jnp.dot(x_ref[...], w1_ref[...],
                 preferred_element_type=jnp.float32) + p1[0:1, :]
    h1 = bn_relu(h1, p1)

    # Layer 2: Linear -> BN -> ReLU  (only the MXU operands are bf16; VPU math stays f32)
    h2 = jnp.dot(h1.astype(jnp.bfloat16), w2_ref[...],
                 preferred_element_type=jnp.float32) + p2[0:1, :]
    h2 = bn_relu(h2, p2)

    # Output Linear
    y = jnp.dot(h2.astype(jnp.bfloat16), w3_ref[...],
                preferred_element_type=jnp.float32) + b3_ref[...]

    # L2 normalize (F.normalize p=2 dim=1):  y / max(||y||, eps) == y * rsqrt(max(||y||^2, eps^2))
    ssq = jnp.sum(y * y, axis=1, keepdims=True)
    inv_norm = jax.lax.rsqrt(jnp.maximum(ssq, NORM_EPS * NORM_EPS))   # EUP
    o_ref[...] = (y * inv_norm).astype(o_ref.dtype)


def embedding_distillation_forward(x, params):
    """x: (B, input_dim) float32. params: dict of weights (see init_params)."""
    B, in_dim = x.shape
    h1_dim = params["w1"].shape[1]
    h2_dim = params["w2"].shape[1]
    out_dim = params["w3"].shape[1]

    # Pad every MXU-facing dim to a lane-dense multiple of 128. Padded rows/cols
    # are zero; padded batch rows are masked out of the BN statistics in-kernel.
    b_pad = _round_up(B, LANE)
    in_pad = _round_up(in_dim, LANE)
    h1_pad = _round_up(h1_dim, LANE)
    h2_pad = _round_up(h2_dim, LANE)
    out_pad = _round_up(out_dim, LANE)

    # bf16 MXU operands (f32 accumulation happens inside the kernel's dots).
    # In a real model the weights would be padded/cast once, not per call.
    x_p = _pad2(x, b_pad, in_pad).astype(jnp.bfloat16)
    w1 = _pad2(params["w1"], in_pad, h1_pad).astype(jnp.bfloat16)
    w2 = _pad2(params["w2"], h1_pad, h2_pad).astype(jnp.bfloat16)
    w3 = _pad2(params["w3"], h2_pad, out_pad).astype(jnp.bfloat16)

    # Stack [linear bias; BN gamma; BN beta] per layer: 2 small DMAs instead of 6.
    p1 = _pad2(jnp.concatenate([params["b1"], params["g1"], params["be1"]], 0), 3, h1_pad)
    p2 = _pad2(jnp.concatenate([params["b2"], params["g2"], params["be2"]], 0), 3, h2_pad)
    b3 = _pad2(params["b3"], 1, out_pad)

    args = (x_p, w1, p1, w2, p2, w3, b3)

    flops = 2 * b_pad * (in_pad * h1_pad + h1_pad * h2_pad + h2_pad * out_pad)
    in_bytes = sum(a.size * a.dtype.itemsize for a in args)
    out_bytes = b_pad * out_pad * 4
    # Rough resident-VMEM estimate: inputs + output + f32 intermediates, with headroom.
    est_vmem = in_bytes + out_bytes + 4 * b_pad * (h1_pad + h2_pad + out_pad)
    vmem_limit = int(min(max(2 * est_vmem, 16 * 1024 * 1024), 56 * 1024 * 1024))

    vmem = pl.BlockSpec(memory_space=pltpu.MemorySpace.VMEM)
    out = pl.pallas_call(
        functools.partial(_distill_kernel, valid_rows=B),
        out_shape=jax.ShapeDtypeStruct((b_pad, out_pad), jnp.float32),
        in_specs=[vmem] * len(args),
        out_specs=vmem,
        compiler_params=pltpu.CompilerParams(vmem_limit_bytes=vmem_limit),
        cost_estimate=pl.CostEstimate(
            flops=flops,
            transcendentals=h1_pad + h2_pad + b_pad,
            bytes_accessed=in_bytes + out_bytes),
    )(*args)

    # TODO(synk): for batches too large for VMEM, add a batch grid with a two-pass
    # BatchNorm (accumulate global per-feature sum/sum-sq across batch tiles, then
    # apply) and mark the batch axis "parallel" so v7x's 2 TensorCores both run.
    return out[:B, :out_dim].astype(x.dtype)


def _xavier_uniform(key, fan_in, fan_out):
    bound = math.sqrt(6.0 / (fan_in + fan_out))
    # stored as (in, out); PyTorch stores (out, in) but the xavier bound is symmetric.
    return jax.random.uniform(key, (fan_in, fan_out), jnp.float32, -bound, bound)


def init_params(key, input_dim, output_dim, hidden_dims=None):
    if hidden_dims is None:
        hidden_dims = [max(input_dim // 2, output_dim * 2),
                       max(input_dim // 4, output_dim)]
    h1, h2 = hidden_dims
    k1, k2, k3 = jax.random.split(key, 3)
    return {
        "w1": _xavier_uniform(k1, input_dim, h1),
        "b1": jnp.zeros((1, h1), jnp.float32),
        "g1": jnp.ones((1, h1), jnp.float32),    # BatchNorm gamma
        "be1": jnp.zeros((1, h1), jnp.float32),  # BatchNorm beta
        "w2": _xavier_uniform(k2, h1, h2),
        "b2": jnp.zeros((1, h2), jnp.float32),
        "g2": jnp.ones((1, h2), jnp.float32),
        "be2": jnp.zeros((1, h2), jnp.float32),
        "w3": _xavier_uniform(k3, h2, output_dim),
        "b3": jnp.zeros((1, output_dim), jnp.float32),
    }


def _reference(x, p):
    """Pure-JAX float32 reference (matches PyTorch training-mode forward)."""
    def bn(h, g, b):
        m = jnp.mean(h, axis=0, keepdims=True)
        v = jnp.mean((h - m) ** 2, axis=0, keepdims=True)
        return (h - m) / jnp.sqrt(v + BN_EPS) * g + b
    h = jnp.maximum(bn(x @ p["w1"] + p["b1"], p["g1"], p["be1"]), 0.0)
    h = jnp.maximum(bn(h @ p["w2"] + p["b2"], p["g2"], p["be2"]), 0.0)
    y = h @ p["w3"] + p["b3"]
    n = jnp.maximum(jnp.sqrt(jnp.sum(y * y, axis=1, keepdims=True)), NORM_EPS)
    return y / n


if __name__ == "__main__":
    key = jax.random.PRNGKey(0)
    kx, kp = jax.random.split(key)

    batch, input_dim, output_dim = 8, 64, 16
    x = jax.random.normal(kx, (batch, input_dim), jnp.float32)
    params = init_params(kp, input_dim, output_dim)

    out = embedding_distillation_forward(x, params)
    out = jax.block_until_ready(out)

    ref = _reference(x, params)
    assert out.shape == (batch, output_dim), out.shape
    # Tolerance loosened vs. the all-f32 version because MXU operands are bf16
    # (f32 accumulation); output is an L2-normalized embedding, so 3e-2 is ample
    # to catch any structural bug while absorbing bf16 rounding.
    assert jnp.allclose(out, ref, atol=3e-2, rtol=3e-2), "mismatch vs reference"
    print("KERNEL_OK")
</pallas_src>

<mosaic_0001>
module attributes {stable_mosaic.version = 11 : i64} {
  func.func @_distill_kernel(%arg0: memref<128x128xbf16, #tpu.memory_space<vmem>>, %arg1: memref<128x128xbf16, #tpu.memory_space<vmem>>, %arg2: memref<3x128xf32, #tpu.memory_space<vmem>>, %arg3: memref<128x128xbf16, #tpu.memory_space<vmem>>, %arg4: memref<3x128xf32, #tpu.memory_space<vmem>>, %arg5: memref<128x128xbf16, #tpu.memory_space<vmem>>, %arg6: memref<1x128xf32, #tpu.memory_space<vmem>>, %arg7: memref<128x128xf32, #tpu.memory_space<vmem>>) attributes {dimension_semantics = [], scalar_prefetch = 0 : i64, scratch_operands = 0 : i64, tpu.core_type = #tpu.core_type<tc>} {
    %0 = tpu.iota {dimensions = array<i32: 0>} : vector<128x1xi32>
    %c8_i32 = arith.constant 8 : i32
    %1 = vector.broadcast %c8_i32 : i32 to vector<128x1xi32>
    %2 = arith.cmpi slt, %0, %1 : vector<128x1xi32>
    %3 = arith.extui %2 : vector<128x1xi1> to vector<128x1xi32>
    %4 = arith.sitofp %3 : vector<128x1xi32> to vector<128x1xf32>
    %c0 = arith.constant 0 : index
    %c0_0 = arith.constant 0 : index
    %5 = vector.load %arg2[%c0, %c0_0] : memref<3x128xf32, #tpu.memory_space<vmem>>, vector<3x128xf32>
    %c0_1 = arith.constant 0 : index
    %c0_2 = arith.constant 0 : index
    %6 = vector.load %arg4[%c0_1, %c0_2] : memref<3x128xf32, #tpu.memory_space<vmem>>, vector<3x128xf32>
    %c0_3 = arith.constant 0 : index
    %c0_4 = arith.constant 0 : index
    %7 = vector.load %arg0[%c0_3, %c0_4] : memref<128x128xbf16, #tpu.memory_space<vmem>>, vector<128x128xbf16>
    %c0_5 = arith.constant 0 : index
    %c0_6 = arith.constant 0 : index
    %8 = vector.load %arg1[%c0_5, %c0_6] : memref<128x128xbf16, #tpu.memory_space<vmem>>, vector<128x128xbf16>
    %cst = arith.constant dense<0.000000e+00> : vector<128x128xf32>
    %9 = tpu.matmul %7, %8, %cst {dimension_numbers = #tpu.dot_dimension_numbers<[1], [0], [0], [1], [0, 0, 1, 1], [], []>} : vector<128x128xbf16>, vector<128x128xbf16>, vector<128x128xf32> -> vector<128x128xf32>
    %10 = vector.extract_strided_slice %5 {offsets = [0, 0], sizes = [1, 128], strides = [1, 1]} : vector<3x128xf32> to vector<1x128xf32>
    %11 = vector.broadcast %10 : vector<1x128xf32> to vector<128x128xf32>
    %12 = arith.addf %9, %11 : vector<128x128xf32>
    %13 = vector.extract_strided_slice %5 {offsets = [1, 0], sizes = [1, 128], strides = [1, 1]} : vector<3x128xf32> to vector<1x128xf32>
    %14 = vector.extract_strided_slice %5 {offsets = [2, 0], sizes = [1, 128], strides = [1, 1]} : vector<3x128xf32> to vector<1x128xf32>
    %15 = vector.broadcast %4 : vector<128x1xf32> to vector<128x128xf32>
    %16 = arith.mulf %12, %15 : vector<128x128xf32>
    %cst_7 = arith.constant dense<0.000000e+00> : vector<128xf32>
    %17 = vector.multi_reduction <add>, %16, %cst_7 [0] : vector<128x128xf32> to vector<128xf32>
    %18 = vector.shape_cast %17 : vector<128xf32> to vector<1x128xf32>
    %19 = arith.mulf %16, %16 : vector<128x128xf32>
    %cst_8 = arith.constant dense<0.000000e+00> : vector<128xf32>
    %20 = vector.multi_reduction <add>, %19, %cst_8 [0] : vector<128x128xf32> to vector<128xf32>
    %21 = vector.shape_cast %20 : vector<128xf32> to vector<1x128xf32>
    %cst_9 = arith.constant 1.250000e-01 : f32
    %22 = vector.broadcast %cst_9 : f32 to vector<1x128xf32>
    %23 = arith.mulf %18, %22 : vector<1x128xf32>
    %cst_10 = arith.constant 1.250000e-01 : f32
    %24 = vector.broadcast %cst_10 : f32 to vector<1x128xf32>
    %25 = arith.mulf %21, %24 : vector<1x128xf32>
    %26 = arith.mulf %23, %23 : vector<1x128xf32>
    %27 = arith.subf %25, %26 : vector<1x128xf32>
    %cst_11 = arith.constant 0.000000e+00 : f32
    %28 = vector.broadcast %cst_11 : f32 to vector<1x128xf32>
    %29 = arith.maximumf %27, %28 : vector<1x128xf32>
    %cst_12 = arith.constant 9.99999974E-6 : f32
    %30 = vector.broadcast %cst_12 : f32 to vector<1x128xf32>
    %31 = arith.addf %29, %30 : vector<1x128xf32>
    %32 = math.rsqrt %31 : vector<1x128xf32>
    %33 = arith.mulf %13, %32 : vector<1x128xf32>
    %34 = arith.mulf %23, %33 : vector<1x128xf32>
    %35 = arith.subf %14, %34 : vector<1x128xf32>
    %36 = vector.broadcast %33 : vector<1x128xf32> to vector<128x128xf32>
    %37 = arith.mulf %12, %36 : vector<128x128xf32>
    %38 = vector.broadcast %35 : vector<1x128xf32> to vector<128x128xf32>
    %39 = arith.addf %37, %38 : vector<128x128xf32>
    %cst_13 = arith.constant 0.000000e+00 : f32
    %40 = vector.broadcast %cst_13 : f32 to vector<128x128xf32>
    %41 = arith.maximumf %39, %40 : vector<128x128xf32>
    %42 = arith.truncf %41 : vector<128x128xf32> to vector<128x128xbf16>
    %c0_14 = arith.constant 0 : index
    %c0_15 = arith.constant 0 : index
    %43 = vector.load %arg3[%c0_14, %c0_15] : memref<128x128xbf16, #tpu.memory_space<vmem>>, vector<128x128xbf16>
    %cst_16 = arith.constant dense<0.000000e+00> : vector<128x128xf32>
    %44 = tpu.matmul %42, %43, %cst_16 {dimension_numbers = #tpu.dot_dimension_numbers<[1], [0], [0], [1], [0, 0, 1, 1], [], []>} : vector<128x128xbf16>, vector<128x128xbf16>, vector<128x128xf32> -> vector<128x128xf32>
    %45 = vector.extract_strided_slice %6 {offsets = [0, 0], sizes = [1, 128], strides = [1, 1]} : vector<3x128xf32> to vector<1x128xf32>
    %46 = vector.broadcast %45 : vector<1x128xf32> to vector<128x128xf32>
    %47 = arith.addf %44, %46 : vector<128x128xf32>
    %48 = vector.extract_strided_slice %6 {offsets = [1, 0], sizes = [1, 128], strides = [1, 1]} : vector<3x128xf32> to vector<1x128xf32>
    %49 = vector.extract_strided_slice %6 {offsets = [2, 0], sizes = [1, 128], strides = [1, 1]} : vector<3x128xf32> to vector<1x128xf32>
    %50 = vector.broadcast %4 : vector<128x1xf32> to vector<128x128xf32>
    %51 = arith.mulf %47, %50 : vector<128x128xf32>
    %cst_17 = arith.constant dense<0.000000e+00> : vector<128xf32>
    %52 = vector.multi_reduction <add>, %51, %cst_17 [0] : vector<128x128xf32> to vector<128xf32>
    %53 = vector.shape_cast %52 : vector<128xf32> to vector<1x128xf32>
    %54 = arith.mulf %51, %51 : vector<128x128xf32>
    %cst_18 = arith.constant dense<0.000000e+00> : vector<128xf32>
    %55 = vector.multi_reduction <add>, %54, %cst_18 [0] : vector<128x128xf32> to vector<128xf32>
    %56 = vector.shape_cast %55 : vector<128xf32> to vector<1x128xf32>
    %cst_19 = arith.constant 1.250000e-01 : f32
    %57 = vector.broadcast %cst_19 : f32 to vector<1x128xf32>
    %58 = arith.mulf %53, %57 : vector<1x128xf32>
    %cst_20 = arith.constant 1.250000e-01 : f32
    %59 = vector.broadcast %cst_20 : f32 to vector<1x128xf32>
    %60 = arith.mulf %56, %59 : vector<1x128xf32>
    %61 = arith.mulf %58, %58 : vector<1x128xf32>
    %62 = arith.subf %60, %61 : vector<1x128xf32>
    %cst_21 = arith.constant 0.000000e+00 : f32
    %63 = vector.broadcast %cst_21 : f32 to vector<1x128xf32>
    %64 = arith.maximumf %62, %63 : vector<1x128xf32>
    %cst_22 = arith.constant 9.99999974E-6 : f32
    %65 = vector.broadcast %cst_22 : f32 to vector<1x128xf32>
    %66 = arith.addf %64, %65 : vector<1x128xf32>
    %67 = math.rsqrt %66 : vector<1x128xf32>
    %68 = arith.mulf %48, %67 : vector<1x128xf32>
    %69 = arith.mulf %58, %68 : vector<1x128xf32>
    %70 = arith.subf %49, %69 : vector<1x128xf32>
    %71 = vector.broadcast %68 : vector<1x128xf32> to vector<128x128xf32>
    %72 = arith.mulf %47, %71 : vector<128x128xf32>
    %73 = vector.broadcast %70 : vector<1x128xf32> to vector<128x128xf32>
    %74 = arith.addf %72, %73 : vector<128x128xf32>
    %cst_23 = arith.constant 0.000000e+00 : f32
    %75 = vector.broadcast %cst_23 : f32 to vector<128x128xf32>
    %76 = arith.maximumf %74, %75 : vector<128x128xf32>
    %77 = arith.truncf %76 : vector<128x128xf32> to vector<128x128xbf16>
    %c0_24 = arith.constant 0 : index
    %c0_25 = arith.constant 0 : index
    %78 = vector.load %arg5[%c0_24, %c0_25] : memref<128x128xbf16, #tpu.memory_space<vmem>>, vector<128x128xbf16>
    %cst_26 = arith.constant dense<0.000000e+00> : vector<128x128xf32>
    %79 = tpu.matmul %77, %78, %cst_26 {dimension_numbers = #tpu.dot_dimension_numbers<[1], [0], [0], [1], [0, 0, 1, 1], [], []>} : vector<128x128xbf16>, vector<128x128xbf16>, vector<128x128xf32> -> vector<128x128xf32>
    %c0_27 = arith.constant 0 : index
    %c0_28 = arith.constant 0 : index
    %80 = vector.load %arg6[%c0_27, %c0_28] : memref<1x128xf32, #tpu.memory_space<vmem>>, vector<1x128xf32>
    %81 = vector.broadcast %80 : vector<1x128xf32> to vector<128x128xf32>
    %82 = arith.addf %79, %81 : vector<128x128xf32>
    %83 = arith.mulf %82, %82 : vector<128x128xf32>
    %cst_29 = arith.constant dense<0.000000e+00> : vector<128xf32>
    %84 = vector.multi_reduction <add>, %83, %cst_29 [1] : vector<128x128xf32> to vector<128xf32>
    %85 = vector.shape_cast %84 : vector<128xf32> to vector<128x1xf32>
    %cst_30 = arith.constant 1.000000e-24 : f32
    %86 = vector.broadcast %cst_30 : f32 to vector<128x1xf32>
    %87 = arith.maximumf %85, %86 : vector<128x1xf32>
    %88 = math.rsqrt %87 : vector<128x1xf32>
    %89 = vector.broadcast %88 : vector<128x1xf32> to vector<128x128xf32>
    %90 = arith.mulf %82, %89 : vector<128x128xf32>
    %c0_31 = arith.constant 0 : index
    %c0_32 = arith.constant 0 : index
    %91 = vector.load %arg7[%c0_31, %c0_32] : memref<128x128xf32, #tpu.memory_space<vmem>>, vector<128x128xf32>
    tpu.vector_store %arg7[%c0_31, %c0_32], %90 {strides = array<i32>} : memref<128x128xf32, #tpu.memory_space<vmem>>, vector<128x128xf32>,
    return
  }
}

</mosaic_0001>

<llo_original>
// kernel: tpu_custom_call.1
$region0: #{tpu_custom_call.1}
  #allocation0 [shape = 'u32[]', space=smem, size = 0x4, offset = 0x4, fixed_abs, tag = 'smem constant byte address 0x4 - core index']
  #allocation1 [shape = 'u32[144,128]{1,0:T(1,128)}', space=vmem, size = 0x12000, scoped, tag = 'internal scratch']
  %s0 = inlined_call_operand.hbm [shape: bf16[128,128], index: 0, kind: input, shape index: {}]
  %s1 = inlined_call_operand.hbm [shape: bf16[128,128], index: 1, kind: input, shape index: {}]
  %s2 = inlined_call_operand.vmem [shape: f32[3,128], index: 2, kind: input, shape index: {}]
  %s3 = inlined_call_operand.hbm [shape: bf16[128,128], index: 3, kind: input, shape index: {}]
  %s4 = inlined_call_operand.vmem [shape: f32[3,128], index: 4, kind: input, shape index: {}]
  %s5 = inlined_call_operand.hbm [shape: bf16[128,128], index: 5, kind: input, shape index: {}]
  %s6 = inlined_call_operand.vmem [shape: f32[1,128], index: 6, kind: input, shape index: {}]
  %s7 = inlined_call_operand.hbm [shape: f32[128,128], index: 7, kind: output, shape index: {}]
  %s8 = sld [smem:[#allocation0]]
  $region54: #{tpu_custom_call.1} parent=0
    _
  %s10 = ssub.s32 1, %s8
  %s11 = scalar_select 0, %s10, %s8
  $region1: #{tpu_custom_call.1} parent=0
    #allocation2 [shape = 'u8[32768]{0}', space=vmem, size = 0x8000, scoped, tag = 'input window, operand 0, single buffered']
    #allocation3 [shape = 's32[1]{0}', space=sflag, size = 0x4, scoped, tag = 'scoped memory for tpu_custom_call.1']
    #allocation4 [shape = 's32[1]{0}', space=sflag, size = 0x4, scoped, tag = 'scoped memory for tpu_custom_call.1']
    #allocation5 [shape = 'u8[32768]{0}', space=vmem, size = 0x8000, scoped, tag = 'input window, operand 1, single buffered']
    #allocation6 [shape = 's32[1]{0}', space=sflag, size = 0x4, scoped, tag = 'scoped memory for tpu_custom_call.1']
    #allocation7 [shape = 'u8[32768]{0}', space=vmem, size = 0x8000, scoped, tag = 'input window, operand 3, single buffered']
    #allocation8 [shape = 'u8[32768]{0}', space=vmem, size = 0x8000, scoped, tag = 'input window, operand 5, single buffered']
    #allocation9 [shape = 's32[1]{0}', space=sflag, size = 0x4, scoped, tag = 'scoped memory for tpu_custom_call.1']
    #allocation10 [shape = 'u8[65536]{0}', space=vmem, size = 0x10000, scoped, tag = 'output window, operand 0, single buffered']
    %12 = vsyncpa [#allocation3], 0
    %13 = vsyncpa [#allocation6], 0
    %14 = vsyncpa [#allocation9], 0
    %15 = vsyncpa [#allocation4], 0
    // Predicated region
    $region2: #{tpu_custom_call.1} parent=1 // pred_check
      _
    $region3: #{tpu_custom_call.1} parent=1 // pred_check_branch
      %17 = sbr.rel (0) target = $region5
    $region4: #{tpu_custom_call.1} parent=1 // pred_region
      %s19 = ssub.s32 1024, 1024
      %20 = vsyncadd [#allocation3], %s19
      %s21 = sshll.u32 [#allocation2], 4
      %s22 = int_to_ptr.vmem [resolvable:$true] %s21
      %27 = dma.hbm_to_vmem [thread:$0]  %s0, 1024, %s22, [#allocation3], 64, 64, 4
    $region5: #{tpu_custom_call.1} parent=1 // pred_fallthru
      _
    // Predicated region
    $region6: #{tpu_custom_call.1} parent=1 // pred_check
      _
    $region7: #{tpu_custom_call.1} parent=1 // pred_check_branch
      %29 = sbr.rel (0) target = $region9
    $region8: #{tpu_custom_call.1} parent=1 // pred_region
      %s31 = ssub.s32 1024, 1024
      %32 = vsyncadd [#allocation6], %s31
      %s33 = sshll.u32 [#allocation5], 4
      %s34 = int_to_ptr.vmem [resolvable:$true] %s33
      %39 = dma.hbm_to_vmem [thread:$0]  %s1, 1024, %s34, [#allocation6], 64, 64, 4
    $region9: #{tpu_custom_call.1} parent=1 // pred_fallthru
      _
    // Predicated region
    $region10: #{tpu_custom_call.1} parent=1 // pred_check
      _
    $region11: #{tpu_custom_call.1} parent=1 // pred_check_branch
      %41 = sbr.rel (0) target = $region13
    $region12: #{tpu_custom_call.1} parent=1 // pred_region
      _
    $region13: #{tpu_custom_call.1} parent=1 // pred_fallthru
      _
    // Predicated region
    $region14: #{tpu_custom_call.1} parent=1 // pred_check
      _
    $region15: #{tpu_custom_call.1} parent=1 // pred_check_branch
      %43 = sbr.rel (0) target = $region17
    $region16: #{tpu_custom_call.1} parent=1 // pred_region
      %s45 = ssub.s32 1024, 1024
      %46 = vsyncadd [#allocation6], %s45
      %s47 = sshll.u32 [#allocation7], 4
      %s48 = int_to_ptr.vmem [resolvable:$true] %s47
      %53 = dma.hbm_to_vmem [thread:$0]  %s3, 1024, %s48, [#allocation6], 64, 64, 4
    $region17: #{tpu_custom_call.1} parent=1 // pred_fallthru
      _
    // Predicated region
    $region18: #{tpu_custom_call.1} parent=1 // pred_check
      _
    $region19: #{tpu_custom_call.1} parent=1 // pred_check_branch
      %55 = sbr.rel (0) target = $region21
    $region20: #{tpu_custom_call.1} parent=1 // pred_region
      _
    $region21: #{tpu_custom_call.1} parent=1 // pred_fallthru
      _
    // Predicated region
    $region22: #{tpu_custom_call.1} parent=1 // pred_check
      _
    $region23: #{tpu_custom_call.1} parent=1 // pred_check_branch
      %57 = sbr.rel (0) target = $region25
    $region24: #{tpu_custom_call.1} parent=1 // pred_region
      %s59 = ssub.s32 1024, 1024
      %60 = vsyncadd [#allocation9], %s59
      %s61 = sshll.u32 [#allocation8], 4
      %s62 = int_to_ptr.vmem [resolvable:$true] %s61
      %67 = dma.hbm_to_vmem [thread:$0]  %s5, 1024, %s62, [#allocation9], 64, 64, 4
    $region25: #{tpu_custom_call.1} parent=1 // pred_fallthru
      _
    // Predicated region
    $region26: #{tpu_custom_call.1} parent=1 // pred_check
      _
    $region27: #{tpu_custom_call.1} parent=1 // pred_check_branch
      %69 = sbr.rel (0) target = $region29
    $region28: #{tpu_custom_call.1} parent=1 // pred_region
      _
    $region29: #{tpu_custom_call.1} parent=1 // pred_fallthru
      _
    // Predicated region
    $region30: #{tpu_custom_call.1} parent=1 // pred_check
      _
    $region31: #{tpu_custom_call.1} parent=1 // pred_check_branch
      %71 = sbr.rel (0) target = $region33
    $region32: #{tpu_custom_call.1} parent=1 // pred_region
      %72 = dma.done [#allocation3], 1024
    $region33: #{tpu_custom_call.1} parent=1 // pred_fallthru
      _
    // Predicated region
    $region34: #{tpu_custom_call.1} parent=1 // pred_check
      _
    $region35: #{tpu_custom_call.1} parent=1 // pred_check_branch
      %74 = sbr.rel (0) target = $region37
    $region36: #{tpu_custom_call.1} parent=1 // pred_region
      %75 = dma.done [#allocation6], 1024
    $region37: #{tpu_custom_call.1} parent=1 // pred_fallthru
      _
    // Predicated region
    $region38: #{tpu_custom_call.1} parent=1 // pred_check
      _
    $region39: #{tpu_custom_call.1} parent=1 // pred_check_branch
      %77 = sbr.rel (0) target = $region41
    $region40: #{tpu_custom_call.1} parent=1 // pred_region
      %78 = dma.done [#allocation6], 1024
    $region41: #{tpu_custom_call.1} parent=1 // pred_fallthru
      _
    // Predicated region
    $region42: #{tpu_custom_call.1} parent=1 // pred_check
      _
    $region43: #{tpu_custom_call.1} parent=1 // pred_check_branch
      %80 = sbr.rel (0) target = $region45
    $region44: #{tpu_custom_call.1} parent=1 // pred_region
      %81 = dma.done [#allocation9], 1024
    $region45: #{tpu_custom_call.1} parent=1 // pred_fallthru
      _
    %v83 = vlaneseq
    %v84 = vshrl.u32 %v83, 7
    %v85 = vadd.s32 %v84, 8
    %v86 = vadd.s32 %v84, 16
    %v87 = vadd.s32 %v84, 24
    %v88 = vadd.s32 %v84, 32
    %v89 = vadd.s32 %v84, 40
    %v90 = vadd.s32 %v84, 48
    %v91 = vadd.s32 %v84, 56
    %v92 = vadd.s32 %v84, 64
    %v93 = vadd.s32 %v84, 72
    %v94 = vadd.s32 %v84, 80
    %v95 = vadd.s32 %v84, 88
    %v96 = vadd.s32 %v84, 96
    %v97 = vadd.s32 %v84, 104
    %v98 = vadd.s32 %v84, 112
    %v99 = vadd.s32 %v84, 120
    %vm100 = vcmp.lt.s32.totalorder %v84, 8
    %vm101 = vcmp.lt.s32.totalorder %v85, 8
    %vm102 = vcmp.lt.s32.totalorder %v86, 8
    %vm103 = vcmp.lt.s32.totalorder %v87, 8
    %vm104 = vcmp.lt.s32.totalorder %v88, 8
    %vm105 = vcmp.lt.s32.totalorder %v89, 8
    %vm106 = vcmp.lt.s32.totalorder %v90, 8
    %vm107 = vcmp.lt.s32.totalorder %v91, 8
    %vm108 = vcmp.lt.s32.totalorder %v92, 8
    %vm109 = vcmp.lt.s32.totalorder %v93, 8
    %vm110 = vcmp.lt.s32.totalorder %v94, 8
    %vm111 = vcmp.lt.s32.totalorder %v95, 8
    %vm112 = vcmp.lt.s32.totalorder %v96, 8
    %vm113 = vcmp.lt.s32.totalorder %v97, 8
    %vm114 = vcmp.lt.s32.totalorder %v98, 8
    %vm115 = vcmp.lt.s32.totalorder %v99, 8
    %v116 = vsel %vm100, 1, 0
    %v117 = vsel %vm101, 1, 0
    %v118 = vsel %vm102, 1, 0
    %v119 = vsel %vm103, 1, 0
    %v120 = vsel %vm104, 1, 0
    %v121 = vsel %vm105, 1, 0
    %v122 = vsel %vm106, 1, 0
    %v123 = vsel %vm107, 1, 0
    %v124 = vsel %vm108, 1, 0
    %v125 = vsel %vm109, 1, 0
    %v126 = vsel %vm110, 1, 0
    %v127 = vsel %vm111, 1, 0
    %v128 = vsel %vm112, 1, 0
    %v129 = vsel %vm113, 1, 0
    %v130 = vsel %vm114, 1, 0
    %v131 = vsel %vm115, 1, 0
    %v132 = vcvt.s32.f32 %v116
    %v133 = vcvt.s32.f32 %v117
    %v134 = vcvt.s32.f32 %v118
    %v135 = vcvt.s32.f32 %v119
    %v136 = vcvt.s32.f32 %v120
    %v137 = vcvt.s32.f32 %v121
    %v138 = vcvt.s32.f32 %v122
    %v139 = vcvt.s32.f32 %v123
    %v140 = vcvt.s32.f32 %v124
    %v141 = vcvt.s32.f32 %v125
    %v142 = vcvt.s32.f32 %v126
    %v143 = vcvt.s32.f32 %v127
    %v144 = vcvt.s32.f32 %v128
    %v145 = vcvt.s32.f32 %v129
    %v146 = vcvt.s32.f32 %v130
    %v147 = vcvt.s32.f32 %v131
    %v148 = vld [vmem:[%s2] sm:$0x7]
    %v149 = vld [vmem:[%s4] sm:$0x7]
    %v150 = vld [vmem:[#allocation2] sm:$0xf]
    %v151 = vld [vmem:[#allocation2 + $0x4] sm:$0xf]
    %v152 = vld [vmem:[#allocation2 + $0x8] sm:$0xf]
    %v153 = vld [vmem:[#allocation2 + $0xc] sm:$0xf]
    %v154 = vld [vmem:[#allocation2 + $0x10] sm:$0xf]
    %v155 = vld [vmem:[#allocation2 + $0x14] sm:$0xf]
    %v156 = vld [vmem:[#allocation2 + $0x18] sm:$0xf]
    %v157 = vld [vmem:[#allocation2 + $0x1c] sm:$0xf]
    %v158 = vld [vmem:[#allocation2 + $0x20] sm:$0xf]
    %v159 = vld [vmem:[#allocation2 + $0x24] sm:$0xf]
    %v160 = vld [vmem:[#allocation2 + $0x28] sm:$0xf]
    %v161 = vld [vmem:[#allocation2 + $0x2c] sm:$0xf]
    %v162 = vld [vmem:[#allocation2 + $0x30] sm:$0xf]
    %v163 = vld [vmem:[#allocation2 + $0x34] sm:$0xf]
    %v164 = vld [vmem:[#allocation2 + $0x38] sm:$0xf]
    %v165 = vld [vmem:[#allocation2 + $0x3c] sm:$0xf]
    %v166 = vld [vmem:[#allocation5] sm:$0xf]
    %v167 = vld [vmem:[#allocation5 + $0x4] sm:$0xf]
    %v168 = vld [vmem:[#allocation5 + $0x8] sm:$0xf]
    %v169 = vld [vmem:[#allocation5 + $0xc] sm:$0xf]
    %v170 = vld [vmem:[#allocation5 + $0x10] sm:$0xf]
    %v171 = vld [vmem:[#allocation5 + $0x14] sm:$0xf]
    %v172 = vld [vmem:[#allocation5 + $0x18] sm:$0xf]
    %v173 = vld [vmem:[#allocation5 + $0x1c] sm:$0xf]
    %v174 = vld [vmem:[#allocation5 + $0x20] sm:$0xf]
    %v175 = vld [vmem:[#allocation5 + $0x24] sm:$0xf]
    %v176 = vld [vmem:[#allocation5 + $0x28] sm:$0xf]
    %v177 = vld [vmem:[#allocation5 + $0x2c] sm:$0xf]
    %v178 = vld [vmem:[#allocation5 + $0x30] sm:$0xf]
    %v179 = vld [vmem:[#allocation5 + $0x34] sm:$0xf]
    %v180 = vld [vmem:[#allocation5 + $0x38] sm:$0xf]
    %v181 = vld [vmem:[#allocation5 + $0x3c] sm:$0xf]
    %v182 = vlaneseq
    %v183 = vshrl.u32 %v182, 7
    %v184 = vsub.s32 0, %v183
    %v185 = vrot.slane %v148, %v184
    %v202 = vunpack.c.l.b16 %v150
    %v203 = vunpack.c.l.b16 %v151
    %v204 = vunpack.c.l.b16 %v152
    %v205 = vunpack.c.l.b16 %v153
    %v206 = vunpack.c.l.b16 %v154
    %v207 = vunpack.c.l.b16 %v155
    %v208 = vunpack.c.l.b16 %v156
    %v209 = vunpack.c.l.b16 %v157
    %v210 = vunpack.c.l.b16 %v158
    %v211 = vunpack.c.l.b16 %v159
    %v212 = vunpack.c.l.b16 %v160
    %v213 = vunpack.c.l.b16 %v161
    %v214 = vunpack.c.l.b16 %v162
    %v215 = vunpack.c.l.b16 %v163
    %v216 = vunpack.c.l.b16 %v164
    %v217 = vunpack.c.l.b16 %v165
    %v218 = vpack.c.b16 %v203, %v202
    %v219 = vpack.c.b16 %v205, %v204
    %v220 = vpack.c.b16 %v207, %v206
    %v221 = vpack.c.b16 %v209, %v208
    %v222 = vpack.c.b16 %v211, %v210
    %v223 = vpack.c.b16 %v213, %v212
    %v224 = vpack.c.b16 %v215, %v214
    %v225 = vpack.c.b16 %v217, %v216
    %v250 = vunpack.c.l.b16 %v166
    %v251 = vunpack.c.l.b16 %v167
    %v252 = vunpack.c.l.b16 %v168
    %v253 = vunpack.c.l.b16 %v169
    %v254 = vunpack.c.l.b16 %v170
    %v255 = vunpack.c.l.b16 %v171
    %v256 = vunpack.c.l.b16 %v172
    %v257 = vunpack.c.l.b16 %v173
    %v258 = vunpack.c.l.b16 %v174
    %v259 = vunpack.c.l.b16 %v175
    %v260 = vunpack.c.l.b16 %v176
    %v261 = vunpack.c.l.b16 %v177
    %v262 = vunpack.c.l.b16 %v178
    %v263 = vunpack.c.l.b16 %v179
    %v264 = vunpack.c.l.b16 %v180
    %v265 = vunpack.c.l.b16 %v181
    %v266 = vpack.c.b16 %v251, %v250
    %v267 = vpack.c.b16 %v253, %v252
    %v268 = vpack.c.b16 %v255, %v254
    %v269 = vpack.c.b16 %v257, %v256
    %v270 = vpack.c.b16 %v259, %v258
    %v271 = vpack.c.b16 %v261, %v260
    %v272 = vpack.c.b16 %v263, %v262
    %v273 = vpack.c.b16 %v265, %v264
    %282 = vmatprep.subr.bf16.mxu0 0
    %283 = vmatpush1.bf16.msra.mxu0 %v266
    %284 = vmatprep.subr.bf16.mxu0 0
    %285 = vmatpush1.bf16.msra.mxu0 %v267
    %286 = vmatprep.subr.bf16.mxu0 0
    %287 = vmatpush1.bf16.msra.mxu0 %v268
    %288 = vmatprep.subr.bf16.mxu0 0
    %289 = vmatpush1.bf16.msra.mxu0 %v269
    %290 = vmatprep.subr.bf16.mxu0 0
    %291 = vmatpush1.bf16.msra.mxu0 %v270
    %292 = vmatprep.subr.bf16.mxu0 0
    %293 = vmatpush1.bf16.msra.mxu0 %v271
    %294 = vmatprep.subr.bf16.mxu0 0
    %295 = vmatpush1.bf16.msra.mxu0 %v272
    %296 = vmatprep.subr.bf16.mxu0 0
    %297 = vmatpush1.bf16.msra.mxu0 %v273
    %298 = vmatprep.subr.bf16.mxu0 0
    %299 = vmatpush1.bf16.msra.mxu0 0
    %300 = vmatprep.subr.bf16.mxu0 0
    %301 = vmatpush1.bf16.msra.mxu0 0
    %302 = vmatprep.subr.bf16.mxu0 0
    %303 = vmatpush1.bf16.msra.mxu0 0
    %304 = vmatprep.subr.bf16.mxu0 0
    %305 = vmatpush1.bf16.msra.mxu0 0
    %306 = vmatprep.subr.bf16.mxu0 0
    %307 = vmatpush1.bf16.msra.mxu0 0
    %308 = vmatprep.subr.bf16.mxu0 0
    %309 = vmatpush1.bf16.msra.mxu0 0
    %310 = vmatprep.subr.bf16.mxu0 0
    %311 = vmatpush1.bf16.msra.mxu0 0
    %312 = vmatprep.subr.bf16.mxu0 0
    %313 = vmatpush1.bf16.msra.mxu0 0
    %314 = vmatprep.mubr.bf16.mxu0 0
    %315 = vmatmul.mubr.bf16.gmra.mrb[0].mxu0 %v218
    %v316 = vpop.f32.mrb[0].mxu0
    %v317 = vadd.f32 %v185, %v316
    %v318 = vpop.f32.mrb[0].mxu0
    %v319 = vpop.f32.mrb[0].mxu0
    %v320 = vadd.f32 %v185, %v319
    %v321 = vpop.f32.mrb[0].mxu0
    %322 = vmatprep.mubr.bf16.mxu0 0
    %323 = vmatmul.mubr.bf16.gmra.mrb[0].mxu0 %v219
    %v324 = vpop.f32.mrb[0].mxu0
    %v325 = vadd.f32 %v185, %v324
    %v326 = vpop.f32.mrb[0].mxu0
    %v327 = vpop.f32.mrb[0].mxu0
    %v328 = vadd.f32 %v185, %v327
    %v329 = vpop.f32.mrb[0].mxu0
    %330 = vmatprep.mubr.bf16.mxu0 0
    %331 = vmatmul.mubr.bf16.gmra.mrb[0].mxu0 %v220
    %v332 = vpop.f32.mrb[0].mxu0
    %v333 = vadd.f32 %v185, %v332
    %v334 = vpop.f32.mrb[0].mxu0
    %v335 = vpop.f32.mrb[0].mxu0
    %v336 = vadd.f32 %v185, %v335
    %v337 = vpop.f32.mrb[0].mxu0
    %338 = vmatprep.mubr.bf16.mxu0 0
    %339 = vmatmul.mubr.bf16.gmra.mrb[0].mxu0 %v221
    %v340 = vpop.f32.mrb[0].mxu0
    %v341 = vadd.f32 %v185, %v340
    %v342 = vpop.f32.mrb[0].mxu0
    %v343 = vpop.f32.mrb[0].mxu0
    %v344 = vadd.f32 %v185, %v343
    %v345 = vpop.f32.mrb[0].mxu0
    %346 = vmatprep.mubr.bf16.mxu0 0
    %347 = vmatmul.mubr.bf16.gmra.mrb[0].mxu0 %v222
    %v348 = vpop.f32.mrb[0].mxu0
    %v349 = vadd.f32 %v185, %v348
    %v350 = vpop.f32.mrb[0].mxu0
    %v351 = vpop.f32.mrb[0].mxu0
    %v352 = vadd.f32 %v185, %v351
    %v353 = vpop.f32.mrb[0].mxu0
    %354 = vmatprep.mubr.bf16.mxu0 0
    %355 = vmatmul.mubr.bf16.gmra.mrb[0].mxu0 %v223
    %v356 = vpop.f32.mrb[0].mxu0
    %v357 = vadd.f32 %v185, %v356
    %v358 = vpop.f32.mrb[0].mxu0
    %v359 = vpop.f32.mrb[0].mxu0
    %v360 = vadd.f32 %v185, %v359
    %v361 = vpop.f32.mrb[0].mxu0
    %362 = vmatprep.mubr.bf16.mxu0 0
    %363 = vmatmul.mubr.bf16.gmra.mrb[0].mxu0 %v224
    %v364 = vpop.f32.mrb[0].mxu0
    %v365 = vadd.f32 %v185, %v364
    %v366 = vpop.f32.mrb[0].mxu0
    %v367 = vpop.f32.mrb[0].mxu0
    %v368 = vadd.f32 %v185, %v367
    %v369 = vpop.f32.mrb[0].mxu0
    %370 = vmatprep.mubr.bf16.mxu0 0
    %371 = vmatmul.mubr.bf16.gmra.mrb[0].mxu0 %v225
    %v372 = vpop.f32.mrb[0].mxu0
    %v373 = vadd.f32 %v185, %v372
    %v374 = vpop.f32.mrb[0].mxu0
    %v375 = vpop.f32.mrb[0].mxu0
    %v376 = vadd.f32 %v185, %v375
    %v377 = vpop.f32.mrb[0].mxu0
    %378 = vdwg.mxu0
    %v379 = vmul.f32 %v317, %v132
    %v380 = vmul.f32 %v320, %v133
    %v381 = vmul.f32 %v325, %v134
    %v382 = vmul.f32 %v328, %v135
    %v383 = vmul.f32 %v333, %v136
    %v384 = vmul.f32 %v336, %v137
    %v385 = vmul.f32 %v341, %v138
    %v386 = vmul.f32 %v344, %v139
    %v387 = vmul.f32 %v349, %v140
    %v388 = vmul.f32 %v352, %v141
    %v389 = vmul.f32 %v357, %v142
    %v390 = vmul.f32 %v360, %v143
    %v391 = vmul.f32 %v365, %v144
    %v392 = vmul.f32 %v368, %v145
    %v393 = vmul.f32 %v373, %v146
    %v394 = vmul.f32 %v376, %v147
    %v395 = vadd.f32 %v379, %v380
    %v396 = vadd.f32 %v395, %v381
    %v397 = vadd.f32 %v396, %v382
    %v398 = vadd.f32 %v397, %v383
    %v399 = vadd.f32 %v398, %v384
    %v400 = vadd.f32 %v399, %v385
    %v401 = vadd.f32 %v400, %v386
    %v402 = vadd.f32 %v401, %v387
    %v403 = vadd.f32 %v402, %v388
    %v404 = vadd.f32 %v403, %v389
    %v405 = vadd.f32 %v404, %v390
    %v406 = vadd.f32 %v405, %v391
    %v407 = vadd.f32 %v406, %v392
    %v408 = vadd.f32 %v407, %v393
    %v409 = vadd.f32 %v408, %v394
    %v410 = vrot.slane %v409, 4
    %v411 = vadd.f32 %v409, %v410
    %v412 = vrot.slane %v411, 2
    %v413 = vadd.f32 %v411, %v412
    %v414 = vrot.slane %v413, 1
    %v415 = vadd.f32 %v413, %v414
    %v416 = vmul.f32 %v379, %v379
    %v417 = vmul.f32 %v380, %v380
    %v418 = vmul.f32 %v381, %v381
    %v419 = vmul.f32 %v382, %v382
    %v420 = vmul.f32 %v383, %v383
    %v421 = vmul.f32 %v384, %v384
    %v422 = vmul.f32 %v385, %v385
    %v423 = vmul.f32 %v386, %v386
    %v424 = vmul.f32 %v387, %v387
    %v425 = vmul.f32 %v388, %v388
    %v426 = vmul.f32 %v389, %v389
    %v427 = vmul.f32 %v390, %v390
    %v428 = vmul.f32 %v391, %v391
    %v429 = vmul.f32 %v392, %v392
    %v430 = vmul.f32 %v393, %v393
    %v431 = vmul.f32 %v394, %v394
    %v432 = vadd.f32 %v416, %v417
    %v433 = vadd.f32 %v432, %v418
    %v434 = vadd.f32 %v433, %v419
    %v435 = vadd.f32 %v434, %v420
    %v436 = vadd.f32 %v435, %v421
    %v437 = vadd.f32 %v436, %v422
    %v438 = vadd.f32 %v437, %v423
    %v439 = vadd.f32 %v438, %v424
    %v440 = vadd.f32 %v439, %v425
    %v441 = vadd.f32 %v440, %v426
    %v442 = vadd.f32 %v441, %v427
    %v443 = vadd.f32 %v442, %v428
    %v444 = vadd.f32 %v443, %v429
    %v445 = vadd.f32 %v444, %v430
    %v446 = vadd.f32 %v445, %v431
    %v447 = vrot.slane %v446, 4
    %v448 = vadd.f32 %v446, %v447
    %v449 = vrot.slane %v448, 2
    %v450 = vadd.f32 %v448, %v449
    %v451 = vrot.slane %v450, 1
    %v452 = vadd.f32 %v450, %v451
    %v453 = vmul.f32 %v415, 0.125
    %v454 = vmul.f32 %v452, 0.125
    %v455 = vmul.f32 %v453, %v453
    %v456 = vsub.f32 %v454, %v455
    %v457 = vmax.f32 %v456, 0.0
    %v458 = vadd.f32 %v457, 1e-05
    %v459 = vrsqrt.pop %v458
    %v460 = vmul.f32 %v148, %v459
    %v461 = vmul.f32 %v453, %v460
    %v463 = vrot.slane %v461, 7
    %v465 = vsub.f32 %v148, %v463
    %v466 = vlaneseq
    %v467 = vshrl.u32 %v466, 7
    %v468 = vsub.s32 1, %v467
    %v469 = vrot.slane %v460, %v468
    %v470 = vmul.f32 %v317, %v469
    %v471 = vmul.f32 %v320, %v469
    %v472 = vmul.f32 %v325, %v469
    %v473 = vmul.f32 %v328, %v469
    %v474 = vmul.f32 %v333, %v469
    %v475 = vmul.f32 %v336, %v469
    %v476 = vmul.f32 %v341, %v469
    %v477 = vmul.f32 %v344, %v469
    %v478 = vmul.f32 %v349, %v469
    %v479 = vmul.f32 %v352, %v469
    %v480 = vmul.f32 %v357, %v469
    %v481 = vmul.f32 %v360, %v469
    %v482 = vmul.f32 %v365, %v469
    %v483 = vmul.f32 %v368, %v469
    %v484 = vmul.f32 %v373, %v469
    %v485 = vmul.f32 %v376, %v469
    %v486 = vlaneseq
    %v487 = vshrl.u32 %v486, 7
    %v488 = vsub.s32 2, %v487
    %v489 = vrot.slane %v465, %v488
    %v490 = vadd.f32 %v470, %v489
    %v491 = vadd.f32 %v471, %v489
    %v492 = vadd.f32 %v472, %v489
    %v493 = vadd.f32 %v473, %v489
    %v494 = vadd.f32 %v474, %v489
    %v495 = vadd.f32 %v475, %v489
    %v496 = vadd.f32 %v476, %v489
    %v497 = vadd.f32 %v477, %v489
    %v498 = vadd.f32 %v478, %v489
    %v499 = vadd.f32 %v479, %v489
    %v500 = vadd.f32 %v480, %v489
    %v501 = vadd.f32 %v481, %v489
    %v502 = vadd.f32 %v482, %v489
    %v503 = vadd.f32 %v483, %v489
    %v504 = vadd.f32 %v484, %v489
    %v505 = vadd.f32 %v485, %v489
    %v506 = vmax.f32 %v490, 0.0
    %v507 = vmax.f32 %v491, 0.0
    %v508 = vmax.f32 %v492, 0.0
    %v509 = vmax.f32 %v493, 0.0
    %v510 = vmax.f32 %v494, 0.0
    %v511 = vmax.f32 %v495, 0.0
    %v512 = vmax.f32 %v496, 0.0
    %v513 = vmax.f32 %v497, 0.0
    %v514 = vmax.f32 %v498, 0.0
    %v515 = vmax.f32 %v499, 0.0
    %v516 = vmax.f32 %v500, 0.0
    %v517 = vmax.f32 %v501, 0.0
    %v518 = vmax.f32 %v502, 0.0
    %v519 = vmax.f32 %v503, 0.0
    %v520 = vmax.f32 %v504, 0.0
    %v521 = vmax.f32 %v505, 0.0
    %v522 = vpack.c.bf16 %v507, %v506
    %v523 = vpack.c.bf16 %v509, %v508
    %v524 = vpack.c.bf16 %v511, %v510
    %v525 = vpack.c.bf16 %v513, %v512
    %v526 = vpack.c.bf16 %v515, %v514
    %v527 = vpack.c.bf16 %v517, %v516
    %v528 = vpack.c.bf16 %v519, %v518
    %v529 = vpack.c.bf16 %v521, %v520
    %v530 = vld [vmem:[#allocation7] sm:$0xf]
    %v531 = vld [vmem:[#allocation7 + $0x4] sm:$0xf]
    %v532 = vld [vmem:[#allocation7 + $0x8] sm:$0xf]
    %v533 = vld [vmem:[#allocation7 + $0xc] sm:$0xf]
    %v534 = vld [vmem:[#allocation7 + $0x10] sm:$0xf]
    %v535 = vld [vmem:[#allocation7 + $0x14] sm:$0xf]
    %v536 = vld [vmem:[#allocation7 + $0x18] sm:$0xf]
    %v537 = vld [vmem:[#allocation7 + $0x1c] sm:$0xf]
    %v538 = vld [vmem:[#allocation7 + $0x20] sm:$0xf]
    %v539 = vld [vmem:[#allocation7 + $0x24] sm:$0xf]
    %v540 = vld [vmem:[#allocation7 + $0x28] sm:$0xf]
    %v541 = vld [vmem:[#allocation7 + $0x2c] sm:$0xf]
    %v542 = vld [vmem:[#allocation7 + $0x30] sm:$0xf]
    %v543 = vld [vmem:[#allocation7 + $0x34] sm:$0xf]
    %v544 = vld [vmem:[#allocation7 + $0x38] sm:$0xf]
    %v545 = vld [vmem:[#allocation7 + $0x3c] sm:$0xf]
    %v546 = vlaneseq
    %v547 = vshrl.u32 %v546, 7
    %v548 = vsub.s32 0, %v547
    %v549 = vrot.slane %v149, %v548
    %v566 = vunpack.c.l.b16 %v530
    %v567 = vunpack.c.l.b16 %v531
    %v568 = vunpack.c.l.b16 %v532
    %v569 = vunpack.c.l.b16 %v533
    %v570 = vunpack.c.l.b16 %v534
    %v571 = vunpack.c.l.b16 %v535
    %v572 = vunpack.c.l.b16 %v536
    %v573 = vunpack.c.l.b16 %v537
    %v574 = vunpack.c.l.b16 %v538
    %v575 = vunpack.c.l.b16 %v539
    %v576 = vunpack.c.l.b16 %v540
    %v577 = vunpack.c.l.b16 %v541
    %v578 = vunpack.c.l.b16 %v542
    %v579 = vunpack.c.l.b16 %v543
    %v580 = vunpack.c.l.b16 %v544
    %v581 = vunpack.c.l.b16 %v545
    %v582 = vpack.c.b16 %v567, %v566
    %v583 = vpack.c.b16 %v569, %v568
    %v584 = vpack.c.b16 %v571, %v570
    %v585 = vpack.c.b16 %v573, %v572
    %v586 = vpack.c.b16 %v575, %v574
    %v587 = vpack.c.b16 %v577, %v576
    %v588 = vpack.c.b16 %v579, %v578
    %v589 = vpack.c.b16 %v581, %v580
    %598 = vmatprep.subr.bf16.mxu0 0
    %599 = vmatpush1.bf16.msra.mxu0 %v582
    %600 = vmatprep.subr.bf16.mxu0 0
    %601 = vmatpush1.bf16.msra.mxu0 %v583
    %602 = vmatprep.subr.bf16.mxu0 0
    %603 = vmatpush1.bf16.msra.mxu0 %v584
    %604 = vmatprep.subr.bf16.mxu0 0
    %605 = vmatpush1.bf16.msra.mxu0 %v585
    %606 = vmatprep.subr.bf16.mxu0 0
    %607 = vmatpush1.bf16.msra.mxu0 %v586
    %608 = vmatprep.subr.bf16.mxu0 0
    %609 = vmatpush1.bf16.msra.mxu0 %v587
    %610 = vmatprep.subr.bf16.mxu0 0
    %611 = vmatpush1.bf16.msra.mxu0 %v588
    %612 = vmatprep.subr.bf16.mxu0 0
    %613 = vmatpush1.bf16.msra.mxu0 %v589
    %614 = vmatprep.subr.bf16.mxu0 0
    %615 = vmatpush1.bf16.msra.mxu0 0
    %616 = vmatprep.subr.bf16.mxu0 0
    %617 = vmatpush1.bf16.msra.mxu0 0
    %618 = vmatprep.subr.bf16.mxu0 0
    %619 = vmatpush1.bf16.msra.mxu0 0
    %620 = vmatprep.subr.bf16.mxu0 0
    %621 = vmatpush1.bf16.msra.mxu0 0
    %622 = vmatprep.subr.bf16.mxu0 0
    %623 = vmatpush1.bf16.msra.mxu0 0
    %624 = vmatprep.subr.bf16.mxu0 0
    %625 = vmatpush1.bf16.msra.mxu0 0
    %626 = vmatprep.subr.bf16.mxu0 0
    %627 = vmatpush1.bf16.msra.mxu0 0
    %628 = vmatprep.subr.bf16.mxu0 0
    %629 = vmatpush1.bf16.msra.mxu0 0
    %630 = vmatprep.mubr.bf16.mxu0 0
    %631 = vmatmul.mubr.bf16.gmra.mrb[0].mxu0 %v522
    %v632 = vpop.f32.mrb[0].mxu0
    %v633 = vadd.f32 %v549, %v632
    %v634 = vpop.f32.mrb[0].mxu0
    %v635 = vpop.f32.mrb[0].mxu0
    %v636 = vadd.f32 %v549, %v635
    %v637 = vpop.f32.mrb[0].mxu0
    %638 = vmatprep.mubr.bf16.mxu0 0
    %639 = vmatmul.mubr.bf16.gmra.mrb[0].mxu0 %v523
    %v640 = vpop.f32.mrb[0].mxu0
    %v641 = vadd.f32 %v549, %v640
    %v642 = vpop.f32.mrb[0].mxu0
    %v643 = vpop.f32.mrb[0].mxu0
    %v644 = vadd.f32 %v549, %v643
    %v645 = vpop.f32.mrb[0].mxu0
    %646 = vmatprep.mubr.bf16.mxu0 0
    %647 = vmatmul.mubr.bf16.gmra.mrb[0].mxu0 %v524
    %v648 = vpop.f32.mrb[0].mxu0
    %v649 = vadd.f32 %v549, %v648
    %v650 = vpop.f32.mrb[0].mxu0
    %v651 = vpop.f32.mrb[0].mxu0
    %v652 = vadd.f32 %v549, %v651
    %v653 = vpop.f32.mrb[0].mxu0
    %654 = vmatprep.mubr.bf16.mxu0 0
    %655 = vmatmul.mubr.bf16.gmra.mrb[0].mxu0 %v525
    %v656 = vpop.f32.mrb[0].mxu0
    %v657 = vadd.f32 %v549, %v656
    %v658 = vpop.f32.mrb[0].mxu0
    %v659 = vpop.f32.mrb[0].mxu0
    %v660 = vadd.f32 %v549, %v659
    %v661 = vpop.f32.mrb[0].mxu0
    %662 = vmatprep.mubr.bf16.mxu0 0
    %663 = vmatmul.mubr.bf16.gmra.mrb[0].mxu0 %v526
    %v664 = vpop.f32.mrb[0].mxu0
    %v665 = vadd.f32 %v549, %v664
    %v666 = vpop.f32.mrb[0].mxu0
    %v667 = vpop.f32.mrb[0].mxu0
    %v668 = vadd.f32 %v549, %v667
    %v669 = vpop.f32.mrb[0].mxu0
    %670 = vmatprep.mubr.bf16.mxu0 0
    %671 = vmatmul.mubr.bf16.gmra.mrb[0].mxu0 %v527
    %v672 = vpop.f32.mrb[0].mxu0
    %v673 = vadd.f32 %v549, %v672
    %v674 = vpop.f32.mrb[0].mxu0
    %v675 = vpop.f32.mrb[0].mxu0
    %v676 = vadd.f32 %v549, %v675
    %v677 = vpop.f32.mrb[0].mxu0
    %678 = vmatprep.mubr.bf16.mxu0 0
    %679 = vmatmul.mubr.bf16.gmra.mrb[0].mxu0 %v528
    %v680 = vpop.f32.mrb[0].mxu0
    %v681 = vadd.f32 %v549, %v680
    %v682 = vpop.f32.mrb[0].mxu0
    %v683 = vpop.f32.mrb[0].mxu0
    %v684 = vadd.f32 %v549, %v683
    %v685 = vpop.f32.mrb[0].mxu0
    %686 = vmatprep.mubr.bf16.mxu0 0
    %687 = vmatmul.mubr.bf16.gmra.mrb[0].mxu0 %v529
    %v688 = vpop.f32.mrb[0].mxu0
    %v689 = vadd.f32 %v549, %v688
    %v690 = vpop.f32.mrb[0].mxu0
    %v691 = vpop.f32.mrb[0].mxu0
    %v692 = vadd.f32 %v549, %v691
    %v693 = vpop.f32.mrb[0].mxu0
    %694 = vdwg.mxu0
    %v695 = vmul.f32 %v633, %v132
    %v696 = vmul.f32 %v636, %v133
    %v697 = vmul.f32 %v641, %v134
    %v698 = vmul.f32 %v644, %v135
    %v699 = vmul.f32 %v649, %v136
    %v700 = vmul.f32 %v652, %v137
    %v701 = vmul.f32 %v657, %v138
    %v702 = vmul.f32 %v660, %v139
    %v703 = vmul.f32 %v665, %v140
    %v704 = vmul.f32 %v668, %v141
    %v705 = vmul.f32 %v673, %v142
    %v706 = vmul.f32 %v676, %v143
    %v707 = vmul.f32 %v681, %v144
    %v708 = vmul.f32 %v684, %v145
    %v709 = vmul.f32 %v689, %v146
    %v710 = vmul.f32 %v692, %v147
    %v711 = vadd.f32 %v695, %v696
    %v712 = vadd.f32 %v711, %v697
    %v713 = vadd.f32 %v712, %v698
    %v714 = vadd.f32 %v713, %v699
    %v715 = vadd.f32 %v714, %v700
    %v716 = vadd.f32 %v715, %v701
    %v717 = vadd.f32 %v716, %v702
    %v718 = vadd.f32 %v717, %v703
    %v719 = vadd.f32 %v718, %v704
    %v720 = vadd.f32 %v719, %v705
    %v721 = vadd.f32 %v720, %v706
    %v722 = vadd.f32 %v721, %v707
    %v723 = vadd.f32 %v722, %v708
    %v724 = vadd.f32 %v723, %v709
    %v725 = vadd.f32 %v724, %v710
    %v726 = vrot.slane %v725, 4
    %v727 = vadd.f32 %v725, %v726
    %v728 = vrot.slane %v727, 2
    %v729 = vadd.f32 %v727, %v728
    %v730 = vrot.slane %v729, 1
    %v731 = vadd.f32 %v729, %v730
    %v732 = vmul.f32 %v695, %v695
    %v733 = vmul.f32 %v696, %v696
    %v734 = vmul.f32 %v697, %v697
    %v735 = vmul.f32 %v698, %v698
    %v736 = vmul.f32 %v699, %v699
    %v737 = vmul.f32 %v700, %v700
    %v738 = vmul.f32 %v701, %v701
    %v739 = vmul.f32 %v702, %v702
    %v740 = vmul.f32 %v703, %v703
    %v741 = vmul.f32 %v704, %v704
    %v742 = vmul.f32 %v705, %v705
    %v743 = vmul.f32 %v706, %v706
    %v744 = vmul.f32 %v707, %v707
    %v745 = vmul.f32 %v708, %v708
    %v746 = vmul.f32 %v709, %v709
    %v747 = vmul.f32 %v710, %v710
    %v748 = vadd.f32 %v732, %v733
    %v749 = vadd.f32 %v748, %v734
    %v750 = vadd.f32 %v749, %v735
    %v751 = vadd.f32 %v750, %v736
    %v752 = vadd.f32 %v751, %v737
    %v753 = vadd.f32 %v752, %v738
    %v754 = vadd.f32 %v753, %v739
    %v755 = vadd.f32 %v754, %v740
    %v756 = vadd.f32 %v755, %v741
    %v757 = vadd.f32 %v756, %v742
    %v758 = vadd.f32 %v757, %v743
    %v759 = vadd.f32 %v758, %v744
    %v760 = vadd.f32 %v759, %v745
    %v761 = vadd.f32 %v760, %v746
    %v762 = vadd.f32 %v761, %v747
    %v763 = vrot.slane %v762, 4
    %v764 = vadd.f32 %v762, %v763
    %v765 = vrot.slane %v764, 2
    %v766 = vadd.f32 %v764, %v765
    %v767 = vrot.slane %v766, 1
    %v768 = vadd.f32 %v766, %v767
    %v769 = vmul.f32 %v731, 0.125
    %v770 = vmul.f32 %v768, 0.125
    %v771 = vmul.f32 %v769, %v769
    %v772 = vsub.f32 %v770, %v771
    %v773 = vmax.f32 %v772, 0.0
    %v774 = vadd.f32 %v773, 1e-05
    %v775 = vrsqrt.pop %v774
    %v776 = vmul.f32 %v149, %v775
    %v777 = vmul.f32 %v769, %v776
    %v779 = vrot.slane %v777, 7
    %v781 = vsub.f32 %v149, %v779
    %v782 = vlaneseq
    %v783 = vshrl.u32 %v782, 7
    %v784 = vsub.s32 1, %v783
    %v785 = vrot.slane %v776, %v784
    %v786 = vmul.f32 %v633, %v785
    %v787 = vmul.f32 %v636, %v785
    %v788 = vmul.f32 %v641, %v785
    %v789 = vmul.f32 %v644, %v785
    %v790 = vmul.f32 %v649, %v785
    %v791 = vmul.f32 %v652, %v785
    %v792 = vmul.f32 %v657, %v785
    %v793 = vmul.f32 %v660, %v785
    %v794 = vmul.f32 %v665, %v785
    %v795 = vmul.f32 %v668, %v785
    %v796 = vmul.f32 %v673, %v785
    %v797 = vmul.f32 %v676, %v785
    %v798 = vmul.f32 %v681, %v785
    %v799 = vmul.f32 %v684, %v785
    %v800 = vmul.f32 %v689, %v785
    %v801 = vmul.f32 %v692, %v785
    %v802 = vlaneseq
    %v803 = vshrl.u32 %v802, 7
    %v804 = vsub.s32 2, %v803
    %v805 = vrot.slane %v781, %v804
    %v806 = vadd.f32 %v786, %v805
    %v807 = vadd.f32 %v787, %v805
    %v808 = vadd.f32 %v788, %v805
    %v809 = vadd.f32 %v789, %v805
    %v810 = vadd.f32 %v790, %v805
    %v811 = vadd.f32 %v791, %v805
    %v812 = vadd.f32 %v792, %v805
    %v813 = vadd.f32 %v793, %v805
    %v814 = vadd.f32 %v794, %v805
    %v815 = vadd.f32 %v795, %v805
    %v816 = vadd.f32 %v796, %v805
    %v817 = vadd.f32 %v797, %v805
    %v818 = vadd.f32 %v798, %v805
    %v819 = vadd.f32 %v799, %v805
    %v820 = vadd.f32 %v800, %v805
    %v821 = vadd.f32 %v801, %v805
    %v822 = vmax.f32 %v806, 0.0
    %v823 = vmax.f32 %v807, 0.0
    %v824 = vmax.f32 %v808, 0.0
    %v825 = vmax.f32 %v809, 0.0
    %v826 = vmax.f32 %v810, 0.0
    %v827 = vmax.f32 %v811, 0.0
    %v828 = vmax.f32 %v812, 0.0
    %v829 = vmax.f32 %v813, 0.0
    %v830 = vmax.f32 %v814, 0.0
    %v831 = vmax.f32 %v815, 0.0
    %v832 = vmax.f32 %v816, 0.0
    %v833 = vmax.f32 %v817, 0.0
    %v834 = vmax.f32 %v818, 0.0
    %v835 = vmax.f32 %v819, 0.0
    %v836 = vmax.f32 %v820, 0.0
    %v837 = vmax.f32 %v821, 0.0
    %v838 = vpack.c.bf16 %v823, %v822
    %v839 = vpack.c.bf16 %v825, %v824
    %v840 = vpack.c.bf16 %v827, %v826
    %v841 = vpack.c.bf16 %v829, %v828
    %v842 = vpack.c.bf16 %v831, %v830
    %v843 = vpack.c.bf16 %v833, %v832
    %v844 = vpack.c.bf16 %v835, %v834
    %v845 = vpack.c.bf16 %v837, %v836
    %v846 = vld [vmem:[#allocation8] sm:$0xf]
    %v847 = vld [vmem:[#allocation8 + $0x4] sm:$0xf]
    %v848 = vld [vmem:[#allocation8 + $0x8] sm:$0xf]
    %v849 = vld [vmem:[#allocation8 + $0xc] sm:$0xf]
    %v850 = vld [vmem:[#allocation8 + $0x10] sm:$0xf]
    %v851 = vld [vmem:[#allocation8 + $0x14] sm:$0xf]
    %v852 = vld [vmem:[#allocation8 + $0x18] sm:$0xf]
    %v853 = vld [vmem:[#allocation8 + $0x1c] sm:$0xf]
    %v854 = vld [vmem:[#allocation8 + $0x20] sm:$0xf]
    %v855 = vld [vmem:[#allocation8 + $0x24] sm:$0xf]
    %v856 = vld [vmem:[#allocation8 + $0x28] sm:$0xf]
    %v857 = vld [vmem:[#allocation8 + $0x2c] sm:$0xf]
    %v858 = vld [vmem:[#allocation8 + $0x30] sm:$0xf]
    %v859 = vld [vmem:[#allocation8 + $0x34] sm:$0xf]
    %v860 = vld [vmem:[#allocation8 + $0x38] sm:$0xf]
    %v861 = vld [vmem:[#allocation8 + $0x3c] sm:$0xf]
    %v862 = vld [vmem:[%s6] sm:$0x1]
    %v864 = vlaneseq
    %v865 = vshrl.u32 %v864, 7
    %v866 = vsub.s32 0, %v865
    %v867 = vrot.slane %v862, %v866
    %v885 = vunpack.c.l.b16 %v846
    %v886 = vunpack.c.l.b16 %v847
    %v887 = vunpack.c.l.b16 %v848
    %v888 = vunpack.c.l.b16 %v849
    %v889 = vunpack.c.l.b16 %v850
    %v890 = vunpack.c.l.b16 %v851
    %v891 = vunpack.c.l.b16 %v852
    %v892 = vunpack.c.l.b16 %v853
    %v893 = vunpack.c.l.b16 %v854
    %v894 = vunpack.c.l.b16 %v855
    %v895 = vunpack.c.l.b16 %v856
    %v896 = vunpack.c.l.b16 %v857
    %v897 = vunpack.c.l.b16 %v858
    %v898 = vunpack.c.l.b16 %v859
    %v899 = vunpack.c.l.b16 %v860
    %v900 = vunpack.c.l.b16 %v861
    %v901 = vpack.c.b16 %v886, %v885
    %v902 = vpack.c.b16 %v888, %v887
    %v903 = vpack.c.b16 %v890, %v889
    %v904 = vpack.c.b16 %v892, %v891
    %v905 = vpack.c.b16 %v894, %v893
    %v906 = vpack.c.b16 %v896, %v895
    %v907 = vpack.c.b16 %v898, %v897
    %v908 = vpack.c.b16 %v900, %v899
    %917 = vmatprep.subr.bf16.mxu0 0
    %918 = vmatpush1.bf16.msra.mxu0 %v901
    %919 = vmatprep.subr.bf16.mxu0 0
    %920 = vmatpush1.bf16.msra.mxu0 %v902
    %921 = vmatprep.subr.bf16.mxu0 0
    %922 = vmatpush1.bf16.msra.mxu0 %v903
    %923 = vmatprep.subr.bf16.mxu0 0
    %924 = vmatpush1.bf16.msra.mxu0 %v904
    %925 = vmatprep.subr.bf16.mxu0 0
    %926 = vmatpush1.bf16.msra.mxu0 %v905
    %927 = vmatprep.subr.bf16.mxu0 0
    %928 = vmatpush1.bf16.msra.mxu0 %v906
    %929 = vmatprep.subr.bf16.mxu0 0
    %930 = vmatpush1.bf16.msra.mxu0 %v907
    %931 = vmatprep.subr.bf16.mxu0 0
    %932 = vmatpush1.bf16.msra.mxu0 %v908
    %933 = vmatprep.subr.bf16.mxu0 0
    %934 = vmatpush1.bf16.msra.mxu0 0
    %935 = vmatprep.subr.bf16.mxu0 0
    %936 = vmatpush1.bf16.msra.mxu0 0
    %937 = vmatprep.subr.bf16.mxu0 0
    %938 = vmatpush1.bf16.msra.mxu0 0
    %939 = vmatprep.subr.bf16.mxu0 0
    %940 = vmatpush1.bf16.msra.mxu0 0
    %941 = vmatprep.subr.bf16.mxu0 0
    %942 = vmatpush1.bf16.msra.mxu0 0
    %943 = vmatprep.subr.bf16.mxu0 0
    %944 = vmatpush1.bf16.msra.mxu0 0
    %945 = vmatprep.subr.bf16.mxu0 0
    %946 = vmatpush1.bf16.msra.mxu0 0
    %947 = vmatprep.subr.bf16.mxu0 0
    %948 = vmatpush1.bf16.msra.mxu0 0
    %949 = vmatprep.mubr.bf16.mxu0 0
    %950 = vmatmul.mubr.bf16.gmra.mrb[0].mxu0 %v838
    %v951 = vpop.f32.mrb[0].mxu0
    %v952 = vadd.f32 %v867, %v951
    %v953 = vpop.f32.mrb[0].mxu0
    %v954 = vpop.f32.mrb[0].mxu0
    %v955 = vadd.f32 %v867, %v954
    %v956 = vpop.f32.mrb[0].mxu0
    %957 = vmatprep.mubr.bf16.mxu0 0
    %958 = vmatmul.mubr.bf16.gmra.mrb[0].mxu0 %v839
    %v959 = vpop.f32.mrb[0].mxu0
    %v960 = vadd.f32 %v867, %v959
    %v961 = vpop.f32.mrb[0].mxu0
    %v962 = vpop.f32.mrb[0].mxu0
    %v963 = vadd.f32 %v867, %v962
    %v964 = vpop.f32.mrb[0].mxu0
    %965 = vmatprep.mubr.bf16.mxu0 0
    %966 = vmatmul.mubr.bf16.gmra.mrb[0].mxu0 %v840
    %v967 = vpop.f32.mrb[0].mxu0
    %v968 = vadd.f32 %v867, %v967
    %v969 = vpop.f32.mrb[0].mxu0
    %v970 = vpop.f32.mrb[0].mxu0
    %v971 = vadd.f32 %v867, %v970
    %v972 = vpop.f32.mrb[0].mxu0
    %973 = vmatprep.mubr.bf16.mxu0 0
    %974 = vmatmul.mubr.bf16.gmra.mrb[0].mxu0 %v841
    %v975 = vpop.f32.mrb[0].mxu0
    %v976 = vadd.f32 %v867, %v975
    %v977 = vpop.f32.mrb[0].mxu0
    %v978 = vpop.f32.mrb[0].mxu0
    %v979 = vadd.f32 %v867, %v978
    %v980 = vpop.f32.mrb[0].mxu0
    %981 = vmatprep.mubr.bf16.mxu0 0
    %982 = vmatmul.mubr.bf16.gmra.mrb[0].mxu0 %v842
    %v983 = vpop.f32.mrb[0].mxu0
    %v984 = vadd.f32 %v867, %v983
    %v985 = vpop.f32.mrb[0].mxu0
    %v986 = vpop.f32.mrb[0].mxu0
    %v987 = vadd.f32 %v867, %v986
    %v988 = vpop.f32.mrb[0].mxu0
    %989 = vmatprep.mubr.bf16.mxu0 0
    %990 = vmatmul.mubr.bf16.gmra.mrb[0].mxu0 %v843
    %v991 = vpop.f32.mrb[0].mxu0
    %v992 = vadd.f32 %v867, %v991
    %v993 = vpop.f32.mrb[0].mxu0
    %v994 = vpop.f32.mrb[0].mxu0
    %v995 = vadd.f32 %v867, %v994
    %v996 = vpop.f32.mrb[0].mxu0
    %997 = vmatprep.mubr.bf16.mxu0 0
    %998 = vmatmul.mubr.bf16.gmra.mrb[0].mxu0 %v844
    %v999 = vpop.f32.mrb[0].mxu0
    %v1000 = vadd.f32 %v867, %v999
    %v1001 = vpop.f32.mrb[0].mxu0
    %v1002 = vpop.f32.mrb[0].mxu0
    %v1003 = vadd.f32 %v867, %v1002
    %v1004 = vpop.f32.mrb[0].mxu0
    %1005 = vmatprep.mubr.bf16.mxu0 0
    %1006 = vmatmul.mubr.bf16.gmra.mrb[0].mxu0 %v845
    %v1007 = vpop.f32.mrb[0].mxu0
    %v1008 = vadd.f32 %v867, %v1007
    %v1009 = vpop.f32.mrb[0].mxu0
    %v1010 = vpop.f32.mrb[0].mxu0
    %v1011 = vadd.f32 %v867, %v1010
    %v1012 = vpop.f32.mrb[0].mxu0
    %1013 = vdwg.mxu0
    %v1014 = vmul.f32 %v952, %v952
    %v1015 = vmul.f32 %v955, %v955
    %v1016 = vmul.f32 %v960, %v960
    %v1017 = vmul.f32 %v963, %v963
    %v1018 = vmul.f32 %v968, %v968
    %v1019 = vmul.f32 %v971, %v971
    %v1020 = vmul.f32 %v976, %v976
    %v1021 = vmul.f32 %v979, %v979
    %v1022 = vmul.f32 %v984, %v984
    %v1023 = vmul.f32 %v987, %v987
    %v1024 = vmul.f32 %v992, %v992
    %v1025 = vmul.f32 %v995, %v995
    %v1026 = vmul.f32 %v1000, %v1000
    %v1027 = vmul.f32 %v1003, %v1003
    %v1028 = vmul.f32 %v1008, %v1008
    %v1029 = vmul.f32 %v1011, %v1011
    %1030 = vadd.xlane.f32.xlu0 %v1014
    %v1031 = vpop.xlane.xlu0 %1030
    %1032 = vadd.xlane.f32.xlu0 %v1015
    %v1033 = vpop.xlane.xlu0 %1032
    %1034 = vadd.xlane.f32.xlu0 %v1016
    %v1035 = vpop.xlane.xlu0 %1034
    %1036 = vadd.xlane.f32.xlu0 %v1017
    %v1037 = vpop.xlane.xlu0 %1036
    %1038 = vadd.xlane.f32.xlu0 %v1018
    %v1039 = vpop.xlane.xlu0 %1038
    %1040 = vadd.xlane.f32.xlu0 %v1019
    %v1041 = vpop.xlane.xlu0 %1040
    %1042 = vadd.xlane.f32.xlu0 %v1020
    %v1043 = vpop.xlane.xlu0 %1042
    %1044 = vadd.xlane.f32.xlu0 %v1021
    %v1045 = vpop.xlane.xlu0 %1044
    %1046 = vadd.xlane.f32.xlu0 %v1022
    %v1047 = vpop.xlane.xlu0 %1046
    %1048 = vadd.xlane.f32.xlu0 %v1023
    %v1049 = vpop.xlane.xlu0 %1048
    %1050 = vadd.xlane.f32.xlu0 %v1024
    %v1051 = vpop.xlane.xlu0 %1050
    %1052 = vadd.xlane.f32.xlu0 %v1025
    %v1053 = vpop.xlane.xlu0 %1052
    %1054 = vadd.xlane.f32.xlu0 %v1026
    %v1055 = vpop.xlane.xlu0 %1054
    %1056 = vadd.xlane.f32.xlu0 %v1027
    %v1057 = vpop.xlane.xlu0 %1056
    %1058 = vadd.xlane.f32.xlu0 %v1028
    %v1059 = vpop.xlane.xlu0 %1058
    %1060 = vadd.xlane.f32.xlu0 %v1029
    %v1061 = vpop.xlane.xlu0 %1060
    %v1062 = vmax.f32 %v1031, 1e-24
    %v1063 = vmax.f32 %v1033, 1e-24
    %v1064 = vmax.f32 %v1035, 1e-24
    %v1065 = vmax.f32 %v1037, 1e-24
    %v1066 = vmax.f32 %v1039, 1e-24
    %v1067 = vmax.f32 %v1041, 1e-24
    %v1068 = vmax.f32 %v1043, 1e-24
    %v1069 = vmax.f32 %v1045, 1e-24
    %v1070 = vmax.f32 %v1047, 1e-24
    %v1071 = vmax.f32 %v1049, 1e-24
    %v1072 = vmax.f32 %v1051, 1e-24
    %v1073 = vmax.f32 %v1053, 1e-24
    %v1074 = vmax.f32 %v1055, 1e-24
    %v1075 = vmax.f32 %v1057, 1e-24
    %v1076 = vmax.f32 %v1059, 1e-24
    %v1077 = vmax.f32 %v1061, 1e-24
    %v1078 = vrsqrt.pop %v1062
    %v1079 = vrsqrt.pop %v1063
    %v1080 = vrsqrt.pop %v1064
    %v1081 = vrsqrt.pop %v1065
    %v1082 = vrsqrt.pop %v1066
    %v1083 = vrsqrt.pop %v1067
    %v1084 = vrsqrt.pop %v1068
    %v1085 = vrsqrt.pop %v1069
    %v1086 = vrsqrt.pop %v1070
    %v1087 = vrsqrt.pop %v1071
    %v1088 = vrsqrt.pop %v1072
    %v1089 = vrsqrt.pop %v1073
    %v1090 = vrsqrt.pop %v1074
    %v1091 = vrsqrt.pop %v1075
    %v1092 = vrsqrt.pop %v1076
    %v1093 = vrsqrt.pop %v1077
    %v1094 = vmul.f32 %v952, %v1078
    %v1095 = vmul.f32 %v955, %v1079
    %v1096 = vmul.f32 %v960, %v1080
    %v1097 = vmul.f32 %v963, %v1081
    %v1098 = vmul.f32 %v968, %v1082
    %v1099 = vmul.f32 %v971, %v1083
    %v1100 = vmul.f32 %v976, %v1084
    %v1101 = vmul.f32 %v979, %v1085
    %v1102 = vmul.f32 %v984, %v1086
    %v1103 = vmul.f32 %v987, %v1087
    %v1104 = vmul.f32 %v992, %v1088
    %v1105 = vmul.f32 %v995, %v1089
    %v1106 = vmul.f32 %v1000, %v1090
    %v1107 = vmul.f32 %v1003, %v1091
    %v1108 = vmul.f32 %v1008, %v1092
    %v1109 = vmul.f32 %v1011, %v1093
    %1110 = vst [vmem:[#allocation10] sm:$0xff] %v1094
    %1111 = vst [vmem:[#allocation10 + $0x8] sm:$0xff] %v1095
    %1112 = vst [vmem:[#allocation10 + $0x10] sm:$0xff] %v1096
    %1113 = vst [vmem:[#allocation10 + $0x18] sm:$0xff] %v1097
    %1114 = vst [vmem:[#allocation10 + $0x20] sm:$0xff] %v1098
    %1115 = vst [vmem:[#allocation10 + $0x28] sm:$0xff] %v1099
    %1116 = vst [vmem:[#allocation10 + $0x30] sm:$0xff] %v1100
    %1117 = vst [vmem:[#allocation10 + $0x38] sm:$0xff] %v1101
    %1118 = vst [vmem:[#allocation10 + $0x40] sm:$0xff] %v1102
    %1119 = vst [vmem:[#allocation10 + $0x48] sm:$0xff] %v1103
    %1120 = vst [vmem:[#allocation10 + $0x50] sm:$0xff] %v1104
    %1121 = vst [vmem:[#allocation10 + $0x58] sm:$0xff] %v1105
    %1122 = vst [vmem:[#allocation10 + $0x60] sm:$0xff] %v1106
    %1123 = vst [vmem:[#allocation10 + $0x68] sm:$0xff] %v1107
    %1124 = vst [vmem:[#allocation10 + $0x70] sm:$0xff] %v1108
    %1125 = vst [vmem:[#allocation10 + $0x78] sm:$0xff] %v1109
    // Predicated region
    $region46: #{tpu_custom_call.1} parent=1 // pred_check
      _
    $region47: #{tpu_custom_call.1} parent=1 // pred_check_branch
      %1127 = sbr.rel (0) target = $region49
    $region48: #{tpu_custom_call.1} parent=1 // pred_region
      %s1129 = ssub.s32 2048, 2048
      %1130 = vsyncadd [#allocation4], %s1129
      %s1131 = sshll.u32 [#allocation10], 4
      %s1132 = int_to_ptr.vmem [resolvable:$true] %s1131
      %1137 = dma.vmem_to_hbm [thread:$0]  %s1132, 2048, %s7, [#allocation4], 128, 128, 8
    $region49: #{tpu_custom_call.1} parent=1 // pred_fallthru
      _
    // Predicated region
    $region50: #{tpu_custom_call.1} parent=1 // pred_check
      _
    $region51: #{tpu_custom_call.1} parent=1 // pred_check_branch
      %1139 = sbr.rel (0) target = $region53
    $region52: #{tpu_custom_call.1} parent=1 // pred_region
      %1140 = dma.done [#allocation4], 2048
    $region53: #{tpu_custom_call.1} parent=1 // pred_fallthru
      _
    %1141 = vsyncpa [#allocation3], 1
    %1142 = vsyncpa [#allocation6], 1
    %1143 = vsyncpa [#allocation9], 1
    %1144 = vsyncpa [#allocation4], 1

</llo_original>
